<compile_context>
chip_gen: v6e
topology: v6e:2x2x1
jax: 0.10.0
libtpu: 0.0.40
codegen_flags: <defaults>
</compile_context>

<pallas_src>
import functools
from typing import NamedTuple

import jax
import jax.numpy as jnp
from jax.experimental import pallas as pl
from jax.experimental.pallas import tpu as pltpu


def _round_up(n: int, m: int) -> int:
    return ((n + m - 1) // m) * m


def _pad_to(arr, target_shape):
    pads = [(0, t - s) for s, t in zip(arr.shape, target_shape)]
    if all(p == (0, 0) for p in pads):
        return arr
    return jnp.pad(arr, pads)


@functools.lru_cache(maxsize=1)
def _vmem_limit_bytes() -> int:
    """Scoped-VMEM request: physical capacity minus ~12.5% headroom."""
    try:
        cap = pltpu.get_tpu_info().vmem_capacity_bytes
    except Exception:
        cap = 64 * 1024 * 1024          # safe default on every current TPU
    return int(cap - cap // 8)          # ~112 MiB on v5e/v6e, ~56 MiB on v7x


def _pick_tn(hp: int, ip: int, itemsize: int) -> int:
    # Largest 128-multiple column block that divides Hp while keeping one
    # streamed weight block (W_ih^T cols + fused W_hh^T cols) <= ~6 MiB so the
    # double-buffered pipeline fits comfortably in scoped VMEM.
    for cand in (512, 256, 128):
        if hp % cand == 0 and (ip + 3 * hp) * cand * itemsize <= 6 * 1024 * 1024:
            return cand
    return 128


class GRUParams(NamedTuple):
    """Pre-laid-out GRUCell parameters (build ONCE with prepare_gru_params)."""
    wih_t: jax.Array    # (Ip, Hp)         compute dtype
    whh_t: jax.Array    # (nn, Hp, 3*TN)   compute dtype, gate-contiguous per column block
    bih: jax.Array      # (1, Hp)          float32
    bhh: jax.Array      # (nn, 1, 3*TN)    float32


def prepare_gru_params(weight_ih, weight_hh, bias_ih, bias_hh,
                       *, compute_dtype=jnp.float32) -> GRUParams:
    """Hoisted one-time weight re-layout: transpose, gate re-order, zero-pad,
    optional bf16 cast.  compute_dtype=jnp.bfloat16 halves weight HBM/VMEM
    bytes (flagged numerics change); accumulation / epilogue stay fp32."""
    H, I = weight_ih.shape
    assert weight_hh.shape == (3 * H, H)
    Ip = _round_up(I, 128)
    Hp = _round_up(H, 128)
    TN = _pick_tn(Hp, Ip, jnp.dtype(compute_dtype).itemsize)
    nn = Hp // TN

    # Input-side projection: (Ip, Hp), zero-padded (pads contribute nothing).
    wih_t = _pad_to(weight_ih.T.astype(compute_dtype), (Ip, Hp))

    # Hidden-side: gate-major (3, Hp, Hp), then re-order columns so each
    # column block j holds its three gates contiguously -> (nn, Hp, 3*TN).
    g = weight_hh.reshape(3, H, H)
    g_t = _pad_to(jnp.transpose(g, (0, 2, 1)).astype(compute_dtype), (3, Hp, Hp))
    whh_t = jnp.transpose(g_t.reshape(3, Hp, nn, TN), (2, 1, 0, 3)).reshape(nn, Hp, 3 * TN)

    bih = _pad_to(bias_ih.reshape(1, H).astype(jnp.float32), (1, Hp))
    bg = _pad_to(bias_hh.reshape(3, 1, H).astype(jnp.float32), (3, 1, Hp))
    bhh = jnp.transpose(bg.reshape(3, 1, nn, TN), (2, 1, 0, 3)).reshape(nn, 1, 3 * TN)

    return GRUParams(wih_t=wih_t, whh_t=whh_t, bih=bih, bhh=bhh)


def gru_cell_kernel(x_ref, h_ref, hcols_ref, wih_ref, whh_ref, bih_ref, bhh_ref, out_ref):
    tn = out_ref.shape[1]

    wih = wih_ref[...]                              # (Ip, TN)  compute dtype
    whh = whh_ref[...]                              # (Hp, 3TN) compute dtype
    x = x_ref[...].astype(wih.dtype)                # (TB, Ip)
    h = h_ref[...].astype(whh.dtype)                # (TB, Hp)

    # Single-gate input projection + fused 3-gate hidden projection.
    i_n = jnp.dot(x, wih, preferred_element_type=jnp.float32) + bih_ref[...]
    gh = jnp.dot(h, whh, preferred_element_type=jnp.float32) + bhh_ref[...]

    # Tile-aligned lane slices (TN is a multiple of 128) — no XLU shuffles.
    h_r = gh[:, :tn]
    h_z = gh[:, tn:2 * tn]
    h_n = gh[:, 2 * tn:]

    resetgate = jax.nn.sigmoid(h_r)                 # EUP
    inputgate = jax.nn.sigmoid(h_z)                 # EUP
    newgate = jnp.tanh(i_n + resetgate * h_n)

    h_cols = hcols_ref[...].astype(jnp.float32)     # fp32 epilogue (v5e-safe)
    out_ref[...] = (newgate + inputgate * (h_cols - newgate)).astype(out_ref.dtype)


def _gru_pallas_call(x_p, h_p, params, *, TB, nb, nn, out_dtype, single_buffer_resident):
    Bp, Ip = x_p.shape
    Hp = h_p.shape[1]
    TN = params.whh_t.shape[2] // 3

    def resident(shape, index_map):
        # Grid-invariant blocks only need one VMEM buffer (halves weight VMEM).
        if single_buffer_resident:
            return pl.BlockSpec(shape, index_map, pipeline_mode=pl.Buffered(1))
        return pl.BlockSpec(shape, index_map)

    return pl.pallas_call(
        gru_cell_kernel,
        out_shape=jax.ShapeDtypeStruct((Bp, Hp), out_dtype),
        grid=(nb, nn),
        in_specs=[
            pl.BlockSpec((TB, Ip), lambda b, j: (b, 0)),           # x (resident across j)
            pl.BlockSpec((TB, Hp), lambda b, j: (b, 0)),           # h, full row (contraction)
            pl.BlockSpec((TB, TN), lambda b, j: (b, j)),           # h, column block (epilogue)
            resident((Ip, TN), lambda b, j: (0, j)),               # W_ih^T column block
            resident((None, Hp, 3 * TN), lambda b, j: (j, 0, 0)),  # fused W_hh^T column block
            resident((1, TN), lambda b, j: (0, j)),                # b_ih column block
            resident((None, 1, 3 * TN), lambda b, j: (j, 0, 0)),   # fused b_hh column block
        ],
        out_specs=pl.BlockSpec((TB, TN), lambda b, j: (b, j)),
        compiler_params=pltpu.CompilerParams(
            dimension_semantics=("parallel", "parallel"),
            vmem_limit_bytes=_vmem_limit_bytes(),
        ),
    )(x_p, h_p, h_p, params.wih_t, params.whh_t, params.bih, params.bhh)


def gru_cell(x, hidden, params: GRUParams):
    """x: (B, I), hidden: (B, H), params: output of prepare_gru_params()."""
    B, I = x.shape
    H = hidden.shape[1]
    Ip, Hp = params.wih_t.shape
    nn = params.whh_t.shape[0]
    TN = params.whh_t.shape[2] // 3
    assert Ip >= I and Hp >= H and nn * TN == Hp, "params do not match input sizes"

    # Batch tiling: every block full (unmasked stores); >= 2 batch blocks for
    # megacore when the column grid has nothing to shard.
    B8 = _round_up(B, 8)
    TB_cap = 256
    if B8 <= 8 or (nn >= 2 and B8 <= TB_cap):
        TB = B8
    elif B8 <= TB_cap:
        TB = _round_up((B8 + 1) // 2, 8)
    else:
        TB = TB_cap
    Bp = _round_up(B8, TB)
    nb = Bp // TB

    x_p = _pad_to(x, (Bp, Ip))
    h_p = _pad_to(hidden, (Bp, Hp))

    single = (nn == 1)  # weight/bias index_maps constant over the whole grid
    try:
        out_p = _gru_pallas_call(x_p, h_p, params, TB=TB, nb=nb, nn=nn,
                                 out_dtype=hidden.dtype,
                                 single_buffer_resident=single)
    except Exception:
        if not single:
            raise
        # Pallas version without BlockSpec.pipeline_mode support: retry with
        # default double-buffering (identical results, slightly more VMEM).
        out_p = _gru_pallas_call(x_p, h_p, params, TB=TB, nb=nb, nn=nn,
                                 out_dtype=hidden.dtype,
                                 single_buffer_resident=False)
    return out_p[:B, :H]


def gru_cell_ref(x, hidden, weight_ih, weight_hh, bias_ih, bias_hh):
    """Pure-JAX reference mirroring the PyTorch forward exactly."""
    i_n = x @ weight_ih.T + bias_ih
    gh = hidden @ weight_hh.T + bias_hh
    H = hidden.shape[1]
    h_r, h_i, h_n = gh[:, :H], gh[:, H:2 * H], gh[:, 2 * H:]
    resetgate = jax.nn.sigmoid(h_r)
    inputgate = jax.nn.sigmoid(h_i)
    newgate = jnp.tanh(i_n + resetgate * h_n)
    return newgate + inputgate * (hidden - newgate)


if __name__ == "__main__":
    input_size = 16
    hidden_size = 32
    batch = 8

    key = jax.random.PRNGKey(0)
    k_x, k_h, k_wih, k_whh, k_bih, k_bhh = jax.random.split(key, 6)

    # Deterministic "randn"-style parameters matching the module's __init__ shapes.
    weight_ih = jax.random.normal(k_wih, (hidden_size, input_size), jnp.float32)
    weight_hh = jax.random.normal(k_whh, (3 * hidden_size, hidden_size), jnp.float32)
    bias_ih = jax.random.normal(k_bih, (hidden_size,), jnp.float32)
    bias_hh = jax.random.normal(k_bhh, (3 * hidden_size,), jnp.float32)

    x = jax.random.normal(k_x, (batch, input_size), jnp.float32)
    hidden = jax.random.normal(k_h, (batch, hidden_size), jnp.float32)

    ref = gru_cell_ref(x, hidden, weight_ih, weight_hh, bias_ih, bias_hh)

    # fp32 path: exact module semantics, tight tolerance.
    params_f32 = jax.block_until_ready(
        prepare_gru_params(weight_ih, weight_hh, bias_ih, bias_hh,
                           compute_dtype=jnp.float32))
    out = jax.block_until_ready(gru_cell(x, hidden, params_f32))
    assert out.shape == (batch, hidden_size)
    assert jnp.allclose(out, ref, atol=1e-5, rtol=1e-5), "fp32 mismatch vs reference"

    # bf16-weight fast path (opt-in; fp32 accumulation + fp32 epilogue).
    params_bf16 = jax.block_until_ready(
        prepare_gru_params(weight_ih, weight_hh, bias_ih, bias_hh,
                           compute_dtype=jnp.bfloat16))
    out_bf16 = jax.block_until_ready(gru_cell(x, hidden, params_bf16))
    assert out_bf16.shape == (batch, hidden_size)
    assert float(jnp.max(jnp.abs(out_bf16 - ref))) < 0.25, "bf16 path diverged"

    print("KERNEL_OK")
</pallas_src>

<mosaic_0001>
module attributes {stable_mosaic.version = 11 : i64} {
  func.func @gru_cell_kernel(%arg0: i32, %arg1: i32, %arg2: memref<8x128xf32, #tpu.memory_space<vmem>>, %arg3: memref<8x128xf32, #tpu.memory_space<vmem>>, %arg4: memref<8x128xf32, #tpu.memory_space<vmem>>, %arg5: memref<128x128xf32, #tpu.memory_space<vmem>>, %arg6: memref<1x128x384xf32, #tpu.memory_space<vmem>>, %arg7: memref<1x128xf32, #tpu.memory_space<vmem>>, %arg8: memref<1x1x384xf32, #tpu.memory_space<vmem>>, %arg9: memref<8x128xf32, #tpu.memory_space<vmem>>) attributes {dimension_semantics = [#tpu.dimension_semantics<parallel>, #tpu.dimension_semantics<parallel>], iteration_bounds = array<i64: 1, 1>, scalar_prefetch = 0 : i64, scratch_operands = 0 : i64, tpu.core_type = #tpu.core_type<tc>, window_params = [{transform_indices = @transform_0, window_bounds = array<i64: 8, 128>}, {transform_indices = @transform_1, window_bounds = array<i64: 8, 128>}, {transform_indices = @transform_2, window_bounds = array<i64: 8, 128>}, {pipeline_mode = #tpu.pipeline_mode<synchronous>, transform_indices = @transform_3, window_bounds = array<i64: 128, 128>}, {pipeline_mode = #tpu.pipeline_mode<synchronous>, transform_indices = @transform_4, window_bounds = array<i64: 1, 128, 384>}, {pipeline_mode = #tpu.pipeline_mode<synchronous>, transform_indices = @transform_5, window_bounds = array<i64: 1, 128>}, {pipeline_mode = #tpu.pipeline_mode<synchronous>, transform_indices = @transform_6, window_bounds = array<i64: 1, 1, 384>}, {transform_indices = @transform_7, window_bounds = array<i64: 8, 128>}]} {
    %c0 = arith.constant 0 : index
    %c0_0 = arith.constant 0 : index
    %0 = vector.load %arg5[%c0, %c0_0] : memref<128x128xf32, #tpu.memory_space<vmem>>, vector<128x128xf32>
    %c0_1 = arith.constant 0 : index
    %c0_2 = arith.constant 0 : index
    %c0_3 = arith.constant 0 : index
    %1 = vector.load %arg6[%c0_1, %c0_2, %c0_3] : memref<1x128x384xf32, #tpu.memory_space<vmem>>, vector<1x128x384xf32>
    %2 = vector.shape_cast %1 : vector<1x128x384xf32> to vector<128x384xf32>
    %c0_4 = arith.constant 0 : index
    %c0_5 = arith.constant 0 : index
    %3 = vector.load %arg2[%c0_4, %c0_5] : memref<8x128xf32, #tpu.memory_space<vmem>>, vector<8x128xf32>
    %c0_6 = arith.constant 0 : index
    %c0_7 = arith.constant 0 : index
    %4 = vector.load %arg3[%c0_6, %c0_7] : memref<8x128xf32, #tpu.memory_space<vmem>>, vector<8x128xf32>
    %cst = arith.constant dense<0.000000e+00> : vector<8x128xf32>
    %5 = tpu.matmul %3, %0, %cst {dimension_numbers = #tpu.dot_dimension_numbers<[1], [0], [0], [1], [0, 0, 1, 1], [], []>} : vector<8x128xf32>, vector<128x128xf32>, vector<8x128xf32> -> vector<8x128xf32>
    %c0_8 = arith.constant 0 : index
    %c0_9 = arith.constant 0 : index
    %6 = vector.load %arg7[%c0_8, %c0_9] : memref<1x128xf32, #tpu.memory_space<vmem>>, vector<1x128xf32>
    %7 = vector.broadcast %6 : vector<1x128xf32> to vector<8x128xf32>
    %8 = arith.addf %5, %7 : vector<8x128xf32>
    %cst_10 = arith.constant dense<0.000000e+00> : vector<8x384xf32>
    %9 = tpu.matmul %4, %2, %cst_10 {dimension_numbers = #tpu.dot_dimension_numbers<[1], [0], [0], [1], [0, 0, 1, 1], [], []>} : vector<8x128xf32>, vector<128x384xf32>, vector<8x384xf32> -> vector<8x384xf32>
    %c0_11 = arith.constant 0 : index
    %c0_12 = arith.constant 0 : index
    %c0_13 = arith.constant 0 : index
    %10 = vector.load %arg8[%c0_11, %c0_12, %c0_13] : memref<1x1x384xf32, #tpu.memory_space<vmem>>, vector<1x1x384xf32>
    %11 = vector.shape_cast %10 : vector<1x1x384xf32> to vector<1x384xf32>
    %12 = vector.broadcast %11 : vector<1x384xf32> to vector<8x384xf32>
    %13 = arith.addf %9, %12 : vector<8x384xf32>
    %14 = vector.extract_strided_slice %13 {offsets = [0, 0], sizes = [8, 128], strides = [1, 1]} : vector<8x384xf32> to vector<8x128xf32>
    %15 = vector.extract_strided_slice %13 {offsets = [0, 128], sizes = [8, 128], strides = [1, 1]} : vector<8x384xf32> to vector<8x128xf32>
    %16 = vector.extract_strided_slice %13 {offsets = [0, 256], sizes = [8, 128], strides = [1, 1]} : vector<8x384xf32> to vector<8x128xf32>
    %17 = arith.negf %14 : vector<8x128xf32>
    %18 = math.exp %17 : vector<8x128xf32>
    %cst_14 = arith.constant 1.000000e+00 : f32
    %19 = vector.broadcast %cst_14 : f32 to vector<8x128xf32>
    %20 = arith.addf %19, %18 : vector<8x128xf32>
    %21 = arith.divf %19, %20 : vector<8x128xf32>
    %22 = arith.negf %15 : vector<8x128xf32>
    %23 = math.exp %22 : vector<8x128xf32>
    %cst_15 = arith.constant 1.000000e+00 : f32
    %24 = vector.broadcast %cst_15 : f32 to vector<8x128xf32>
    %25 = arith.addf %24, %23 : vector<8x128xf32>
    %26 = arith.divf %24, %25 : vector<8x128xf32>
    %27 = arith.mulf %21, %16 : vector<8x128xf32>
    %28 = arith.addf %8, %27 : vector<8x128xf32>
    %29 = math.tanh %28 : vector<8x128xf32>
    %c0_16 = arith.constant 0 : index
    %c0_17 = arith.constant 0 : index
    %30 = vector.load %arg4[%c0_16, %c0_17] : memref<8x128xf32, #tpu.memory_space<vmem>>, vector<8x128xf32>
    %31 = arith.subf %30, %29 : vector<8x128xf32>
    %32 = arith.mulf %26, %31 : vector<8x128xf32>
    %33 = arith.addf %29, %32 : vector<8x128xf32>
    %c0_18 = arith.constant 0 : index
    %c0_19 = arith.constant 0 : index
    %34 = vector.load %arg9[%c0_18, %c0_19] : memref<8x128xf32, #tpu.memory_space<vmem>>, vector<8x128xf32>
    tpu.vector_store %arg9[%c0_18, %c0_19], %33 {strides = array<i32>} : memref<8x128xf32, #tpu.memory_space<vmem>>, vector<8x128xf32>,
    return
  }
  func.func @transform_0(%arg0: i32, %arg1: i32) -> (i32, i32) {
    %c0_i32 = arith.constant 0 : i32
    %c0_i32_0 = arith.constant 0 : i32
    return %arg0, %c0_i32 : i32, i32
  }
  func.func @transform_1(%arg0: i32, %arg1: i32) -> (i32, i32) {
    %c0_i32 = arith.constant 0 : i32
    %c0_i32_0 = arith.constant 0 : i32
    return %arg0, %c0_i32 : i32, i32
  }
  func.func @transform_2(%arg0: i32, %arg1: i32) -> (i32, i32) {
    %c0_i32 = arith.constant 0 : i32
    return %arg0, %arg1 : i32, i32
  }
  func.func @transform_3(%arg0: i32, %arg1: i32) -> (i32, i32) {
    %c0_i32 = arith.constant 0 : i32
    %c0_i32_0 = arith.constant 0 : i32
    return %c0_i32, %arg1 : i32, i32
  }
  func.func @transform_4(%arg0: i32, %arg1: i32) -> (i32, i32, i32) {
    %c0_i32 = arith.constant 0 : i32
    %c0_i32_0 = arith.constant 0 : i32
    %c0_i32_1 = arith.constant 0 : i32
    return %arg1, %c0_i32, %c0_i32_0 : i32, i32, i32
  }
  func.func @transform_5(%arg0: i32, %arg1: i32) -> (i32, i32) {
    %c0_i32 = arith.constant 0 : i32
    %c0_i32_0 = arith.constant 0 : i32
    return %c0_i32, %arg1 : i32, i32
  }
  func.func @transform_6(%arg0: i32, %arg1: i32) -> (i32, i32, i32) {
    %c0_i32 = arith.constant 0 : i32
    %c0_i32_0 = arith.constant 0 : i32
    %c0_i32_1 = arith.constant 0 : i32
    return %arg1, %c0_i32, %c0_i32_0 : i32, i32, i32
  }
  func.func @transform_7(%arg0: i32, %arg1: i32) -> (i32, i32) {
    %c0_i32 = arith.constant 0 : i32
    return %arg0, %arg1 : i32, i32
  }
}

module attributes {stable_mosaic.version = 11 : i64} {
  func.func @gru_cell_kernel(%arg0: i32, %arg1: i32, %arg2: memref<8x128xf32, #tpu.memory_space<vmem>>, %arg3: memref<8x128xf32, #tpu.memory_space<vmem>>, %arg4: memref<8x128xf32, #tpu.memory_space<vmem>>, %arg5: memref<128x128xf32, #tpu.memory_space<vmem>>, %arg6: memref<1x128x384xf32, #tpu.memory_space<vmem>>, %arg7: memref<1x128xf32, #tpu.memory_space<vmem>>, %arg8: memref<1x1x384xf32, #tpu.memory_space<vmem>>, %arg9: memref<8x128xf32, #tpu.memory_space<vmem>>) attributes {dimension_semantics = [#tpu.dimension_semantics<parallel>, #tpu.dimension_semantics<parallel>], iteration_bounds = array<i64: 1, 1>, scalar_prefetch = 0 : i64, scratch_operands = 0 : i64, tpu.core_type = #tpu.core_type<tc>, window_params = [{transform_indices = @transform_0, window_bounds = array<i64: 8, 128>}, {transform_indices = @transform_1, window_bounds = array<i64: 8, 128>}, {transform_indices = @transform_2, window_bounds = array<i64: 8, 128>}, {transform_indices = @transform_3, window_bounds = array<i64: 128, 128>}, {transform_indices = @transform_4, window_bounds = array<i64: 1, 128, 384>}, {transform_indices = @transform_5, window_bounds = array<i64: 1, 128>}, {transform_indices = @transform_6, window_bounds = array<i64: 1, 1, 384>}, {transform_indices = @transform_7, window_bounds = array<i64: 8, 128>}]} {
    %c0 = arith.constant 0 : index
    %c0_0 = arith.constant 0 : index
    %0 = vector.load %arg5[%c0, %c0_0] : memref<128x128xf32, #tpu.memory_space<vmem>>, vector<128x128xf32>
    %c0_1 = arith.constant 0 : index
    %c0_2 = arith.constant 0 : index
    %c0_3 = arith.constant 0 : index
    %1 = vector.load %arg6[%c0_1, %c0_2, %c0_3] : memref<1x128x384xf32, #tpu.memory_space<vmem>>, vector<1x128x384xf32>
    %2 = vector.shape_cast %1 : vector<1x128x384xf32> to vector<128x384xf32>
    %c0_4 = arith.constant 0 : index
    %c0_5 = arith.constant 0 : index
    %3 = vector.load %arg2[%c0_4, %c0_5] : memref<8x128xf32, #tpu.memory_space<vmem>>, vector<8x128xf32>
    %c0_6 = arith.constant 0 : index
    %c0_7 = arith.constant 0 : index
    %4 = vector.load %arg3[%c0_6, %c0_7] : memref<8x128xf32, #tpu.memory_space<vmem>>, vector<8x128xf32>
    %cst = arith.constant dense<0.000000e+00> : vector<8x128xf32>
    %5 = tpu.matmul %3, %0, %cst {dimension_numbers = #tpu.dot_dimension_numbers<[1], [0], [0], [1], [0, 0, 1, 1], [], []>} : vector<8x128xf32>, vector<128x128xf32>, vector<8x128xf32> -> vector<8x128xf32>
    %c0_8 = arith.constant 0 : index
    %c0_9 = arith.constant 0 : index
    %6 = vector.load %arg7[%c0_8, %c0_9] : memref<1x128xf32, #tpu.memory_space<vmem>>, vector<1x128xf32>
    %7 = vector.broadcast %6 : vector<1x128xf32> to vector<8x128xf32>
    %8 = arith.addf %5, %7 : vector<8x128xf32>
    %cst_10 = arith.constant dense<0.000000e+00> : vector<8x384xf32>
    %9 = tpu.matmul %4, %2, %cst_10 {dimension_numbers = #tpu.dot_dimension_numbers<[1], [0], [0], [1], [0, 0, 1, 1], [], []>} : vector<8x128xf32>, vector<128x384xf32>, vector<8x384xf32> -> vector<8x384xf32>
    %c0_11 = arith.constant 0 : index
    %c0_12 = arith.constant 0 : index
    %c0_13 = arith.constant 0 : index
    %10 = vector.load %arg8[%c0_11, %c0_12, %c0_13] : memref<1x1x384xf32, #tpu.memory_space<vmem>>, vector<1x1x384xf32>
    %11 = vector.shape_cast %10 : vector<1x1x384xf32> to vector<1x384xf32>
    %12 = vector.broadcast %11 : vector<1x384xf32> to vector<8x384xf32>
    %13 = arith.addf %9, %12 : vector<8x384xf32>
    %14 = vector.extract_strided_slice %13 {offsets = [0, 0], sizes = [8, 128], strides = [1, 1]} : vector<8x384xf32> to vector<8x128xf32>
    %15 = vector.extract_strided_slice %13 {offsets = [0, 128], sizes = [8, 128], strides = [1, 1]} : vector<8x384xf32> to vector<8x128xf32>
    %16 = vector.extract_strided_slice %13 {offsets = [0, 256], sizes = [8, 128], strides = [1, 1]} : vector<8x384xf32> to vector<8x128xf32>
    %17 = arith.negf %14 : vector<8x128xf32>
    %18 = math.exp %17 : vector<8x128xf32>
    %cst_14 = arith.constant 1.000000e+00 : f32
    %19 = vector.broadcast %cst_14 : f32 to vector<8x128xf32>
    %20 = arith.addf %19, %18 : vector<8x128xf32>
    %21 = arith.divf %19, %20 : vector<8x128xf32>
    %22 = arith.negf %15 : vector<8x128xf32>
    %23 = math.exp %22 : vector<8x128xf32>
    %cst_15 = arith.constant 1.000000e+00 : f32
    %24 = vector.broadcast %cst_15 : f32 to vector<8x128xf32>
    %25 = arith.addf %24, %23 : vector<8x128xf32>
    %26 = arith.divf %24, %25 : vector<8x128xf32>
    %27 = arith.mulf %21, %16 : vector<8x128xf32>
    %28 = arith.addf %8, %27 : vector<8x128xf32>
    %29 = math.tanh %28 : vector<8x128xf32>
    %c0_16 = arith.constant 0 : index
    %c0_17 = arith.constant 0 : index
    %30 = vector.load %arg4[%c0_16, %c0_17] : memref<8x128xf32, #tpu.memory_space<vmem>>, vector<8x128xf32>
    %31 = arith.subf %30, %29 : vector<8x128xf32>
    %32 = arith.mulf %26, %31 : vector<8x128xf32>
    %33 = arith.addf %29, %32 : vector<8x128xf32>
    %c0_18 = arith.constant 0 : index
    %c0_19 = arith.constant 0 : index
    %34 = vector.load %arg9[%c0_18, %c0_19] : memref<8x128xf32, #tpu.memory_space<vmem>>, vector<8x128xf32>
    tpu.vector_store %arg9[%c0_18, %c0_19], %33 {strides = array<i32>} : memref<8x128xf32, #tpu.memory_space<vmem>>, vector<8x128xf32>,
    return
  }
  func.func @transform_0(%arg0: i32, %arg1: i32) -> (i32, i32) {
    %c0_i32 = arith.constant 0 : i32
    %c0_i32_0 = arith.constant 0 : i32
    return %arg0, %c0_i32 : i32, i32
  }
  func.func @transform_1(%arg0: i32, %arg1: i32) -> (i32, i32) {
    %c0_i32 = arith.constant 0 : i32
    %c0_i32_0 = arith.constant 0 : i32
    return %arg0, %c0_i32 : i32, i32
  }
  func.func @transform_2(%arg0: i32, %arg1: i32) -> (i32, i32) {
    %c0_i32 = arith.constant 0 : i32
    return %arg0, %arg1 : i32, i32
  }
  func.func @transform_3(%arg0: i32, %arg1: i32) -> (i32, i32) {
    %c0_i32 = arith.constant 0 : i32
    %c0_i32_0 = arith.constant 0 : i32
    return %c0_i32, %arg1 : i32, i32
  }
  func.func @transform_4(%arg0: i32, %arg1: i32) -> (i32, i32, i32) {
    %c0_i32 = arith.constant 0 : i32
    %c0_i32_0 = arith.constant 0 : i32
    %c0_i32_1 = arith.constant 0 : i32
    return %arg1, %c0_i32, %c0_i32_0 : i32, i32, i32
  }
  func.func @transform_5(%arg0: i32, %arg1: i32) -> (i32, i32) {
    %c0_i32 = arith.constant 0 : i32
    %c0_i32_0 = arith.constant 0 : i32
    return %c0_i32, %arg1 : i32, i32
  }
  func.func @transform_6(%arg0: i32, %arg1: i32) -> (i32, i32, i32) {
    %c0_i32 = arith.constant 0 : i32
    %c0_i32_0 = arith.constant 0 : i32
    %c0_i32_1 = arith.constant 0 : i32
    return %arg1, %c0_i32, %c0_i32_0 : i32, i32, i32
  }
  func.func @transform_7(%arg0: i32, %arg1: i32) -> (i32, i32) {
    %c0_i32 = arith.constant 0 : i32
    return %arg0, %arg1 : i32, i32
  }
}

</mosaic_0001>

<llo_original>
// kernel: tpu_custom_call.1
$region0: #{tpu_custom_call.1}
  #allocation0 [shape = 'u32[]', space=smem, size = 0x4, offset = 0x4, fixed_abs, tag = 'smem constant byte address 0x4 - core index']
  #allocation1 [shape = 'u32[144,128]{1,0:T(1,128)}', space=vmem, size = 0x12000, scoped, tag = 'internal scratch']
  %s0 = inlined_call_operand.hbm [shape: f32[8,128], index: 0, kind: input, shape index: {}]
  %s1 = inlined_call_operand.hbm [shape: f32[8,128], index: 1, kind: input, shape index: {}]
  %s2 = inlined_call_operand.hbm [shape: f32[8,128], index: 2, kind: input, shape index: {}]
  %s3 = inlined_call_operand.hbm [shape: f32[128,128], index: 3, kind: input, shape index: {}]
  %s4 = inlined_call_operand.hbm [shape: f32[1,128,384], index: 4, kind: input, shape index: {}]
  %s5 = inlined_call_operand.vmem [shape: f32[1,128], index: 5, kind: input, shape index: {}]
  %s6 = inlined_call_operand.vmem [shape: f32[1,1,384], index: 6, kind: input, shape index: {}]
  %s7 = inlined_call_operand.hbm [shape: f32[8,128], index: 7, kind: output, shape index: {}]
  %s8 = sld [smem:[#allocation0]]
  $region58: #{tpu_custom_call.1} parent=0
    _
  %s10 = ssub.s32 1, %s8
  %s11 = scalar_select 0, %s10, %s8
  $region1: #{tpu_custom_call.1} parent=0
    #allocation2 [shape = 'u8[4096]{0}', space=vmem, size = 0x1000, scoped, tag = 'input window, operand 0, single buffered']
    #allocation3 [shape = 's32[1]{0}', space=sflag, size = 0x4, scoped, tag = 'scoped memory for tpu_custom_call.1']
    #allocation4 [shape = 's32[1]{0}', space=sflag, size = 0x4, scoped, tag = 'scoped memory for tpu_custom_call.1']
    #allocation5 [shape = 'u8[4096]{0}', space=vmem, size = 0x1000, scoped, tag = 'input window, operand 1, single buffered']
    #allocation6 [shape = 's32[1]{0}', space=sflag, size = 0x4, scoped, tag = 'scoped memory for tpu_custom_call.1']
    #allocation7 [shape = 'u8[4096]{0}', space=vmem, size = 0x1000, scoped, tag = 'input window, operand 2, single buffered']
    #allocation8 [shape = 'u8[65536]{0}', space=vmem, size = 0x10000, scoped, tag = 'input window, operand 3, single buffered']
    #allocation9 [shape = 's32[1]{0}', space=sflag, size = 0x4, scoped, tag = 'scoped memory for tpu_custom_call.1']
    #allocation10 [shape = 'u8[196608]{0}', space=vmem, size = 0x30000, scoped, tag = 'input window, operand 4, single buffered']
    #allocation11 [shape = 'u8[4096]{0}', space=vmem, size = 0x1000, scoped, tag = 'output window, operand 0, single buffered']
    %12 = vsyncpa [#allocation3], 0
    %13 = vsyncpa [#allocation6], 0
    %14 = vsyncpa [#allocation9], 0
    %15 = vsyncpa [#allocation4], 0
    // Predicated region
    $region2: #{tpu_custom_call.1} parent=1 // pred_check
      _
    $region3: #{tpu_custom_call.1} parent=1 // pred_check_branch
      %17 = sbr.rel (0) target = $region5
    $region4: #{tpu_custom_call.1} parent=1 // pred_region
      %s19 = ssub.s32 128, 128
      %20 = vsyncadd [#allocation3], %s19
      %s22 = sshll.u32 [#allocation2], 4
      %s23 = int_to_ptr.vmem [resolvable:$true] %s22
      %25 = dma.hbm_to_vmem [thread:$0]  %s0, 128, %s23, [#allocation3]
    $region5: #{tpu_custom_call.1} parent=1 // pred_fallthru
      _
    // Predicated region
    $region6: #{tpu_custom_call.1} parent=1 // pred_check
      _
    $region7: #{tpu_custom_call.1} parent=1 // pred_check_branch
      %27 = sbr.rel (0) target = $region9
    $region8: #{tpu_custom_call.1} parent=1 // pred_region
      %s29 = ssub.s32 128, 128
      %30 = vsyncadd [#allocation6], %s29
      %s32 = sshll.u32 [#allocation5], 4
      %s33 = int_to_ptr.vmem [resolvable:$true] %s32
      %35 = dma.hbm_to_vmem [thread:$0]  %s1, 128, %s33, [#allocation6]
    $region9: #{tpu_custom_call.1} parent=1 // pred_fallthru
      _
    // Predicated region
    $region10: #{tpu_custom_call.1} parent=1 // pred_check
      _
    $region11: #{tpu_custom_call.1} parent=1 // pred_check_branch
      %37 = sbr.rel (0) target = $region13
    $region12: #{tpu_custom_call.1} parent=1 // pred_region
      %s39 = ssub.s32 128, 128
      %40 = vsyncadd [#allocation6], %s39
      %s42 = sshll.u32 [#allocation7], 4
      %s43 = int_to_ptr.vmem [resolvable:$true] %s42
      %45 = dma.hbm_to_vmem [thread:$0]  %s2, 128, %s43, [#allocation6]
    $region13: #{tpu_custom_call.1} parent=1 // pred_fallthru
      _
    // Predicated region
    $region14: #{tpu_custom_call.1} parent=1 // pred_check
      _
    $region15: #{tpu_custom_call.1} parent=1 // pred_check_branch
      %47 = sbr.rel (0) target = $region17
    $region16: #{tpu_custom_call.1} parent=1 // pred_region
      %s49 = ssub.s32 2048, 2048
      %50 = vsyncadd [#allocation9], %s49
      %s51 = sshll.u32 [#allocation8], 4
      %s52 = int_to_ptr.vmem [resolvable:$true] %s51
      %57 = dma.hbm_to_vmem [thread:$0]  %s3, 2048, %s52, [#allocation9], 128, 128, 8
    $region17: #{tpu_custom_call.1} parent=1 // pred_fallthru
      _
    // Predicated region
    $region18: #{tpu_custom_call.1} parent=1 // pred_check
      _
    $region19: #{tpu_custom_call.1} parent=1 // pred_check_branch
      %59 = sbr.rel (0) target = $region21
    $region20: #{tpu_custom_call.1} parent=1 // pred_region
      %s61 = ssub.s32 6144, 6144
      %62 = vsyncadd [#allocation9], %s61
      %s63 = sshll.u32 [#allocation10], 4
      %s64 = int_to_ptr.vmem [resolvable:$true] %s63
      %69 = dma.hbm_to_vmem [thread:$0]  %s4, 6144, %s64, [#allocation9], 384, 384, 24
    $region21: #{tpu_custom_call.1} parent=1 // pred_fallthru
      _
    // Predicated region
    $region22: #{tpu_custom_call.1} parent=1 // pred_check
      _
    $region23: #{tpu_custom_call.1} parent=1 // pred_check_branch
      %71 = sbr.rel (0) target = $region25
    $region24: #{tpu_custom_call.1} parent=1 // pred_region
      _
    $region25: #{tpu_custom_call.1} parent=1 // pred_fallthru
      _
    // Predicated region
    $region26: #{tpu_custom_call.1} parent=1 // pred_check
      _
    $region27: #{tpu_custom_call.1} parent=1 // pred_check_branch
      %73 = sbr.rel (0) target = $region29
    $region28: #{tpu_custom_call.1} parent=1 // pred_region
      _
    $region29: #{tpu_custom_call.1} parent=1 // pred_fallthru
      _
    // Predicated region
    $region30: #{tpu_custom_call.1} parent=1 // pred_check
      _
    $region31: #{tpu_custom_call.1} parent=1 // pred_check_branch
      %75 = sbr.rel (0) target = $region33
    $region32: #{tpu_custom_call.1} parent=1 // pred_region
      %76 = dma.done [#allocation3], 128
    $region33: #{tpu_custom_call.1} parent=1 // pred_fallthru
      _
    // Predicated region
    $region34: #{tpu_custom_call.1} parent=1 // pred_check
      _
    $region35: #{tpu_custom_call.1} parent=1 // pred_check_branch
      %78 = sbr.rel (0) target = $region37
    $region36: #{tpu_custom_call.1} parent=1 // pred_region
      %79 = dma.done [#allocation6], 128
    $region37: #{tpu_custom_call.1} parent=1 // pred_fallthru
      _
    // Predicated region
    $region38: #{tpu_custom_call.1} parent=1 // pred_check
      _
    $region39: #{tpu_custom_call.1} parent=1 // pred_check_branch
      %81 = sbr.rel (0) target = $region41
    $region40: #{tpu_custom_call.1} parent=1 // pred_region
      %82 = dma.done [#allocation6], 128
    $region41: #{tpu_custom_call.1} parent=1 // pred_fallthru
      _
    // Predicated region
    $region42: #{tpu_custom_call.1} parent=1 // pred_check
      _
    $region43: #{tpu_custom_call.1} parent=1 // pred_check_branch
      %84 = sbr.rel (0) target = $region45
    $region44: #{tpu_custom_call.1} parent=1 // pred_region
      %85 = dma.done [#allocation9], 2048
    $region45: #{tpu_custom_call.1} parent=1 // pred_fallthru
      _
    // Predicated region
    $region46: #{tpu_custom_call.1} parent=1 // pred_check
      _
    $region47: #{tpu_custom_call.1} parent=1 // pred_check_branch
      %87 = sbr.rel (0) target = $region49
    $region48: #{tpu_custom_call.1} parent=1 // pred_region
      %88 = dma.done [#allocation9], 6144
    $region49: #{tpu_custom_call.1} parent=1 // pred_fallthru
      _
    %v89 = vld [vmem:[#allocation8] sm:$0xff]
    %v90 = vld [vmem:[#allocation8 + $0x8] sm:$0xff]
    %v91 = vld [vmem:[#allocation8 + $0x10] sm:$0xff]
    %v92 = vld [vmem:[#allocation8 + $0x18] sm:$0xff]
    %v93 = vld [vmem:[#allocation8 + $0x20] sm:$0xff]
    %v94 = vld [vmem:[#allocation8 + $0x28] sm:$0xff]
    %v95 = vld [vmem:[#allocation8 + $0x30] sm:$0xff]
    %v96 = vld [vmem:[#allocation8 + $0x38] sm:$0xff]
    %v97 = vld [vmem:[#allocation8 + $0x40] sm:$0xff]
    %v98 = vld [vmem:[#allocation8 + $0x48] sm:$0xff]
    %v99 = vld [vmem:[#allocation8 + $0x50] sm:$0xff]
    %v100 = vld [vmem:[#allocation8 + $0x58] sm:$0xff]
    %v101 = vld [vmem:[#allocation8 + $0x60] sm:$0xff]
    %v102 = vld [vmem:[#allocation8 + $0x68] sm:$0xff]
    %v103 = vld [vmem:[#allocation8 + $0x70] sm:$0xff]
    %v104 = vld [vmem:[#allocation8 + $0x78] sm:$0xff]
    %v105 = vld [vmem:[#allocation10] sm:$0xff]
    %v106 = vld [vmem:[#allocation10 + $0x8] sm:$0xff]
    %v107 = vld [vmem:[#allocation10 + $0x10] sm:$0xff]
    %v108 = vld [vmem:[#allocation10 + $0x18] sm:$0xff]
    %v109 = vld [vmem:[#allocation10 + $0x20] sm:$0xff]
    %v110 = vld [vmem:[#allocation10 + $0x28] sm:$0xff]
    %v111 = vld [vmem:[#allocation10 + $0x30] sm:$0xff]
    %v112 = vld [vmem:[#allocation10 + $0x38] sm:$0xff]
    %v113 = vld [vmem:[#allocation10 + $0x40] sm:$0xff]
    %v114 = vld [vmem:[#allocation10 + $0x48] sm:$0xff]
    %v115 = vld [vmem:[#allocation10 + $0x50] sm:$0xff]
    %v116 = vld [vmem:[#allocation10 + $0x58] sm:$0xff]
    %v117 = vld [vmem:[#allocation10 + $0x60] sm:$0xff]
    %v118 = vld [vmem:[#allocation10 + $0x68] sm:$0xff]
    %v119 = vld [vmem:[#allocation10 + $0x70] sm:$0xff]
    %v120 = vld [vmem:[#allocation10 + $0x78] sm:$0xff]
    %v121 = vld [vmem:[#allocation10 + $0x80] sm:$0xff]
    %v122 = vld [vmem:[#allocation10 + $0x88] sm:$0xff]
    %v123 = vld [vmem:[#allocation10 + $0x90] sm:$0xff]
    %v124 = vld [vmem:[#allocation10 + $0x98] sm:$0xff]
    %v125 = vld [vmem:[#allocation10 + $0xa0] sm:$0xff]
    %v126 = vld [vmem:[#allocation10 + $0xa8] sm:$0xff]
    %v127 = vld [vmem:[#allocation10 + $0xb0] sm:$0xff]
    %v128 = vld [vmem:[#allocation10 + $0xb8] sm:$0xff]
    %v129 = vld [vmem:[#allocation10 + $0xc0] sm:$0xff]
    %v130 = vld [vmem:[#allocation10 + $0xc8] sm:$0xff]
    %v131 = vld [vmem:[#allocation10 + $0xd0] sm:$0xff]
    %v132 = vld [vmem:[#allocation10 + $0xd8] sm:$0xff]
    %v133 = vld [vmem:[#allocation10 + $0xe0] sm:$0xff]
    %v134 = vld [vmem:[#allocation10 + $0xe8] sm:$0xff]
    %v135 = vld [vmem:[#allocation10 + $0xf0] sm:$0xff]
    %v136 = vld [vmem:[#allocation10 + $0xf8] sm:$0xff]
    %v137 = vld [vmem:[#allocation10 + $0x100] sm:$0xff]
    %v138 = vld [vmem:[#allocation10 + $0x108] sm:$0xff]
    %v139 = vld [vmem:[#allocation10 + $0x110] sm:$0xff]
    %v140 = vld [vmem:[#allocation10 + $0x118] sm:$0xff]
    %v141 = vld [vmem:[#allocation10 + $0x120] sm:$0xff]
    %v142 = vld [vmem:[#allocation10 + $0x128] sm:$0xff]
    %v143 = vld [vmem:[#allocation10 + $0x130] sm:$0xff]
    %v144 = vld [vmem:[#allocation10 + $0x138] sm:$0xff]
    %v145 = vld [vmem:[#allocation10 + $0x140] sm:$0xff]
    %v146 = vld [vmem:[#allocation10 + $0x148] sm:$0xff]
    %v147 = vld [vmem:[#allocation10 + $0x150] sm:$0xff]
    %v148 = vld [vmem:[#allocation10 + $0x158] sm:$0xff]
    %v149 = vld [vmem:[#allocation10 + $0x160] sm:$0xff]
    %v150 = vld [vmem:[#allocation10 + $0x168] sm:$0xff]
    %v151 = vld [vmem:[#allocation10 + $0x170] sm:$0xff]
    %v152 = vld [vmem:[#allocation10 + $0x178] sm:$0xff]
    %v153 = vld [vmem:[#allocation2] sm:$0xff]
    %v154 = vld [vmem:[#allocation5] sm:$0xff]
    %v155 = vld [vmem:[%s5] sm:$0x1]
    %v157 = vlaneseq
    %v158 = vshrl.u32 %v157, 7
    %v159 = vsub.s32 0, %v158
    %v160 = vrot.slane %v155, %v159
    %162 = vmatprep.subr.mxu0 0.0
    %163 = vmatpush1.msra.mxu0 %v104
    %164 = vmatprep.subr.mxu0 0.0
    %165 = vmatpush1.msra.mxu0 %v103
    %166 = vmatprep.subr.mxu0 0.0
    %167 = vmatpush1.msra.mxu0 %v102
    %168 = vmatprep.subr.mxu0 0.0
    %169 = vmatpush1.msra.mxu0 %v101
    %170 = vmatprep.subr.mxu0 0.0
    %171 = vmatpush1.msra.mxu0 %v100
    %172 = vmatprep.subr.mxu0 0.0
    %173 = vmatpush1.msra.mxu0 %v99
    %174 = vmatprep.subr.mxu0 0.0
    %175 = vmatpush1.msra.mxu0 %v98
    %176 = vmatprep.subr.mxu0 0.0
    %177 = vmatpush1.msra.mxu0 %v97
    %178 = vmatprep.subr.mxu0 0.0
    %179 = vmatpush1.msra.mxu0 %v96
    %180 = vmatprep.subr.mxu0 0.0
    %181 = vmatpush1.msra.mxu0 %v95
    %182 = vmatprep.subr.mxu0 0.0
    %183 = vmatpush1.msra.mxu0 %v94
    %184 = vmatprep.subr.mxu0 0.0
    %185 = vmatpush1.msra.mxu0 %v93
    %186 = vmatprep.subr.mxu0 0.0
    %187 = vmatpush1.msra.mxu0 %v92
    %188 = vmatprep.subr.mxu0 0.0
    %189 = vmatpush1.msra.mxu0 %v91
    %190 = vmatprep.subr.mxu0 0.0
    %191 = vmatpush1.msra.mxu0 %v90
    %192 = vmatprep.subr.mxu0 0.0
    %193 = vmatpush1.msra.mxu0 %v89
    %194 = vmatprep.subr.mxu0 0.0
    %195 = vmatpush2.msra.mxu0 0.0
    %196 = vmatprep.subr.mxu0 0.0
    %197 = vmatpush2.msra.mxu0 0.0
    %198 = vmatprep.subr.mxu0 0.0
    %199 = vmatpush2.msra.mxu0 0.0
    %200 = vmatprep.subr.mxu0 0.0
    %201 = vmatpush2.msra.mxu0 0.0
    %202 = vmatprep.subr.mxu0 0.0
    %203 = vmatpush2.msra.mxu0 0.0
    %204 = vmatprep.subr.mxu0 0.0
    %205 = vmatpush2.msra.mxu0 0.0
    %206 = vmatprep.subr.mxu0 0.0
    %207 = vmatpush2.msra.mxu0 0.0
    %208 = vmatprep.subr.mxu0 0.0
    %209 = vmatpush2.msra.mxu0 0.0
    %210 = vmatprep.subr.mxu0 0.0
    %211 = vmatpush2.msra.mxu0 0.0
    %212 = vmatprep.subr.mxu0 0.0
    %213 = vmatpush2.msra.mxu0 0.0
    %214 = vmatprep.subr.mxu0 0.0
    %215 = vmatpush2.msra.mxu0 0.0
    %216 = vmatprep.subr.mxu0 0.0
    %217 = vmatpush2.msra.mxu0 0.0
    %218 = vmatprep.subr.mxu0 0.0
    %219 = vmatpush2.msra.mxu0 0.0
    %220 = vmatprep.subr.mxu0 0.0
    %221 = vmatpush2.msra.mxu0 0.0
    %222 = vmatprep.subr.mxu0 0.0
    %223 = vmatpush2.msra.mxu0 0.0
    %224 = vmatprep.subr.mxu0 0.0
    %225 = vmatpush2.msra.mxu0 0.0
    %226 = vmatprep.mubr.f32.mxu0 0.0
    %227 = vmatmul.mubr.f32.gmra.mxu0 %v153
    %v228 = vpop.f32.mrf.mxu0
    %v229 = vadd.f32 %v160, %v228
    %v230 = vpop.f32.mrf.mxu0
    %231 = vdwg.mxu0
    %v232 = vld [vmem:[%s6] sm:$0x7]
    %v234 = vlaneseq
    %v235 = vshrl.u32 %v234, 7
    %v236 = vsub.s32 0, %v235
    %v237 = vrot.slane %v232, %v236
    %v238 = vlaneseq
    %v239 = vshrl.u32 %v238, 7
    %v240 = vsub.s32 1, %v239
    %v241 = vrot.slane %v232, %v240
    %v242 = vlaneseq
    %v243 = vshrl.u32 %v242, 7
    %v244 = vsub.s32 2, %v243
    %v245 = vrot.slane %v232, %v244
    %249 = vmatprep.subr.mxu0 %v151
    %250 = vmatpush1.msra.mxu0 %v150
    %251 = vmatprep.subr.mxu0 %v148
    %252 = vmatpush1.msra.mxu0 %v147
    %253 = vmatprep.subr.mxu0 %v145
    %254 = vmatpush1.msra.mxu0 %v144
    %255 = vmatprep.subr.mxu0 %v142
    %256 = vmatpush1.msra.mxu0 %v141
    %257 = vmatprep.subr.mxu0 %v139
    %258 = vmatpush1.msra.mxu0 %v138
    %259 = vmatprep.subr.mxu0 %v136
    %260 = vmatpush1.msra.mxu0 %v135
    %261 = vmatprep.subr.mxu0 %v133
    %262 = vmatpush1.msra.mxu0 %v132
    %263 = vmatprep.subr.mxu0 %v130
    %264 = vmatpush1.msra.mxu0 %v129
    %265 = vmatprep.subr.mxu0 %v127
    %266 = vmatpush1.msra.mxu0 %v126
    %267 = vmatprep.subr.mxu0 %v124
    %268 = vmatpush1.msra.mxu0 %v123
    %269 = vmatprep.subr.mxu0 %v121
    %270 = vmatpush1.msra.mxu0 %v120
    %271 = vmatprep.subr.mxu0 %v118
    %272 = vmatpush1.msra.mxu0 %v117
    %273 = vmatprep.subr.mxu0 %v115
    %274 = vmatpush1.msra.mxu0 %v114
    %275 = vmatprep.subr.mxu0 %v112
    %276 = vmatpush1.msra.mxu0 %v111
    %277 = vmatprep.subr.mxu0 %v109
    %278 = vmatpush1.msra.mxu0 %v108
    %279 = vmatprep.subr.mxu0 %v106
    %280 = vmatpush1.msra.mxu0 %v105
    %281 = vmatprep.subr.mxu0 0.0
    %282 = vmatpush2.msra.mxu0 0.0
    %283 = vmatprep.subr.mxu0 0.0
    %284 = vmatpush2.msra.mxu0 0.0
    %285 = vmatprep.subr.mxu0 0.0
    %286 = vmatpush2.msra.mxu0 0.0
    %287 = vmatprep.subr.mxu0 0.0
    %288 = vmatpush2.msra.mxu0 0.0
    %289 = vmatprep.subr.mxu0 0.0
    %290 = vmatpush2.msra.mxu0 0.0
    %291 = vmatprep.subr.mxu0 0.0
    %292 = vmatpush2.msra.mxu0 0.0
    %293 = vmatprep.subr.mxu0 0.0
    %294 = vmatpush2.msra.mxu0 0.0
    %295 = vmatprep.subr.mxu0 0.0
    %296 = vmatpush2.msra.mxu0 0.0
    %297 = vmatprep.subr.mxu0 0.0
    %298 = vmatpush2.msra.mxu0 0.0
    %299 = vmatprep.subr.mxu0 0.0
    %300 = vmatpush2.msra.mxu0 0.0
    %301 = vmatprep.subr.mxu0 0.0
    %302 = vmatpush2.msra.mxu0 0.0
    %303 = vmatprep.subr.mxu0 0.0
    %304 = vmatpush2.msra.mxu0 0.0
    %305 = vmatprep.subr.mxu0 0.0
    %306 = vmatpush2.msra.mxu0 0.0
    %307 = vmatprep.subr.mxu0 0.0
    %308 = vmatpush2.msra.mxu0 0.0
    %309 = vmatprep.subr.mxu0 0.0
    %310 = vmatpush2.msra.mxu0 0.0
    %311 = vmatprep.subr.mxu0 0.0
    %312 = vmatpush2.msra.mxu0 0.0
    %313 = vmatprep.mubr.f32.mxu0 0.0
    %314 = vmatmul.mubr.f32.gmra.mxu0 %v154
    %v315 = vpop.f32.mrf.mxu0
    %v316 = vadd.f32 %v237, %v315
    %v317 = vpop.f32.mrf.mxu0
    %v318 = vadd.f32 %v241, %v317
    %319 = vdwg.mxu0
    %320 = vmatprep.subr.mxu0 0.0
    %321 = vmatpush1.msra.mxu0 %v152
    %322 = vmatprep.subr.mxu0 0.0
    %323 = vmatpush1.msra.mxu0 %v149
    %324 = vmatprep.subr.mxu0 0.0
    %325 = vmatpush1.msra.mxu0 %v146
    %326 = vmatprep.subr.mxu0 0.0
    %327 = vmatpush1.msra.mxu0 %v143
    %328 = vmatprep.subr.mxu0 0.0
    %329 = vmatpush1.msra.mxu0 %v140
    %330 = vmatprep.subr.mxu0 0.0
    %331 = vmatpush1.msra.mxu0 %v137
    %332 = vmatprep.subr.mxu0 0.0
    %333 = vmatpush1.msra.mxu0 %v134
    %334 = vmatprep.subr.mxu0 0.0
    %335 = vmatpush1.msra.mxu0 %v131
    %336 = vmatprep.subr.mxu0 0.0
    %337 = vmatpush1.msra.mxu0 %v128
    %338 = vmatprep.subr.mxu0 0.0
    %339 = vmatpush1.msra.mxu0 %v125
    %340 = vmatprep.subr.mxu0 0.0
    %341 = vmatpush1.msra.mxu0 %v122
    %342 = vmatprep.subr.mxu0 0.0
    %343 = vmatpush1.msra.mxu0 %v119
    %344 = vmatprep.subr.mxu0 0.0
    %345 = vmatpush1.msra.mxu0 %v116
    %346 = vmatprep.subr.mxu0 0.0
    %347 = vmatpush1.msra.mxu0 %v113
    %348 = vmatprep.subr.mxu0 0.0
    %349 = vmatpush1.msra.mxu0 %v110
    %350 = vmatprep.subr.mxu0 0.0
    %351 = vmatpush1.msra.mxu0 %v107
    %352 = vmatprep.subr.mxu0 0.0
    %353 = vmatpush2.msra.mxu0 0.0
    %354 = vmatprep.subr.mxu0 0.0
    %355 = vmatpush2.msra.mxu0 0.0
    %356 = vmatprep.subr.mxu0 0.0
    %357 = vmatpush2.msra.mxu0 0.0
    %358 = vmatprep.subr.mxu0 0.0
    %359 = vmatpush2.msra.mxu0 0.0
    %360 = vmatprep.subr.mxu0 0.0
    %361 = vmatpush2.msra.mxu0 0.0
    %362 = vmatprep.subr.mxu0 0.0
    %363 = vmatpush2.msra.mxu0 0.0
    %364 = vmatprep.subr.mxu0 0.0
    %365 = vmatpush2.msra.mxu0 0.0
    %366 = vmatprep.subr.mxu0 0.0
    %367 = vmatpush2.msra.mxu0 0.0
    %368 = vmatprep.subr.mxu0 0.0
    %369 = vmatpush2.msra.mxu0 0.0
    %370 = vmatprep.subr.mxu0 0.0
    %371 = vmatpush2.msra.mxu0 0.0
    %372 = vmatprep.subr.mxu0 0.0
    %373 = vmatpush2.msra.mxu0 0.0
    %374 = vmatprep.subr.mxu0 0.0
    %375 = vmatpush2.msra.mxu0 0.0
    %376 = vmatprep.subr.mxu0 0.0
    %377 = vmatpush2.msra.mxu0 0.0
    %378 = vmatprep.subr.mxu0 0.0
    %379 = vmatpush2.msra.mxu0 0.0
    %380 = vmatprep.subr.mxu0 0.0
    %381 = vmatpush2.msra.mxu0 0.0
    %382 = vmatprep.subr.mxu0 0.0
    %383 = vmatpush2.msra.mxu0 0.0
    %384 = vmatprep.mubr.f32.mxu0 0.0
    %385 = vmatmul.mubr.f32.gmra.mxu0 %v154
    %v386 = vpop.f32.mrf.mxu0
    %v387 = vadd.f32 %v245, %v386
    %v388 = vpop.f32.mrf.mxu0
    %389 = vdwg.mxu0
    %v390 = vxor.u32 %v316, 2147483648
    %v391 = vmul.f32 %v390, 1.442695
    %v392 = vpow.pop %v391
    %v393 = vadd.f32 %v392, 1.0
    %v394 = vrcp.pop %v393
    %v395 = vmul.f32 1.0, %v394
    %v396 = vxor.u32 %v318, 2147483648
    %v397 = vmul.f32 %v396, 1.442695
    %v398 = vpow.pop %v397
    %v399 = vadd.f32 %v398, 1.0
    %v400 = vrcp.pop %v399
    %v401 = vmul.f32 1.0, %v400
    %v402 = vmul.f32 %v395, %v387
    %v403 = vadd.f32 %v229, %v402
    %v404 = vtanh.pop %v403
    %v405 = vld [vmem:[#allocation7] sm:$0xff]
    %v406 = vsub.f32 %v405, %v404
    %v407 = vmul.f32 %v401, %v406
    %v408 = vadd.f32 %v404, %v407
    %409 = vst [vmem:[#allocation11] sm:$0xff] %v408
    // Predicated region
    $region50: #{tpu_custom_call.1} parent=1 // pred_check
      _
    $region51: #{tpu_custom_call.1} parent=1 // pred_check_branch
      %411 = sbr.rel (0) target = $region53
    $region52: #{tpu_custom_call.1} parent=1 // pred_region
      %s413 = ssub.s32 128, 128
      %414 = vsyncadd [#allocation4], %s413
      %s416 = sshll.u32 [#allocation11], 4
      %s417 = int_to_ptr.vmem [resolvable:$true] %s416
      %419 = dma.vmem_to_hbm [thread:$0]  %s417, 128, %s7, [#allocation4]
    $region53: #{tpu_custom_call.1} parent=1 // pred_fallthru
      _
    // Predicated region
    $region54: #{tpu_custom_call.1} parent=1 // pred_check
      _
    $region55: #{tpu_custom_call.1} parent=1 // pred_check_branch
      %421 = sbr.rel (0) target = $region57
    $region56: #{tpu_custom_call.1} parent=1 // pred_region
      %422 = dma.done [#allocation4], 128
    $region57: #{tpu_custom_call.1} parent=1 // pred_fallthru
      _
    %423 = vsyncpa [#allocation3], 1
    %424 = vsyncpa [#allocation6], 1
    %425 = vsyncpa [#allocation9], 1
    %426 = vsyncpa [#allocation4], 1

// kernel: tpu_custom_call.1
$region0: #{tpu_custom_call.1}
  #allocation0 [shape = 'u32[]', space=smem, size = 0x4, offset = 0x4, fixed_abs, tag = 'smem constant byte address 0x4 - core index']
  #allocation1 [shape = 'u32[144,128]{1,0:T(1,128)}', space=vmem, size = 0x12000, scoped, tag = 'internal scratch']
  %s0 = inlined_call_operand.hbm [shape: f32[8,128], index: 0, kind: input, shape index: {}]
  %s1 = inlined_call_operand.hbm [shape: f32[8,128], index: 1, kind: input, shape index: {}]
  %s2 = inlined_call_operand.hbm [shape: f32[8,128], index: 2, kind: input, shape index: {}]
  %s3 = inlined_call_operand.hbm [shape: f32[128,128], index: 3, kind: input, shape index: {}]
  %s4 = inlined_call_operand.hbm [shape: f32[1,128,384], index: 4, kind: input, shape index: {}]
  %s5 = inlined_call_operand.vmem [shape: f32[1,128], index: 5, kind: input, shape index: {}]
  %s6 = inlined_call_operand.vmem [shape: f32[1,1,384], index: 6, kind: input, shape index: {}]
  %s7 = inlined_call_operand.hbm [shape: f32[8,128], index: 7, kind: output, shape index: {}]
  %s8 = sld [smem:[#allocation0]]
  $region58: #{tpu_custom_call.1} parent=0
    _
  %s10 = ssub.s32 1, %s8
  %s11 = scalar_select 0, %s10, %s8
  $region1: #{tpu_custom_call.1} parent=0
    #allocation2 [shape = 'u8[4096]{0}', space=vmem, size = 0x1000, scoped, tag = 'input window, operand 0, single buffered']
    #allocation3 [shape = 's32[1]{0}', space=sflag, size = 0x4, scoped, tag = 'scoped memory for tpu_custom_call.1']
    #allocation4 [shape = 's32[1]{0}', space=sflag, size = 0x4, scoped, tag = 'scoped memory for tpu_custom_call.1']
    #allocation5 [shape = 'u8[4096]{0}', space=vmem, size = 0x1000, scoped, tag = 'input window, operand 1, single buffered']
    #allocation6 [shape = 's32[1]{0}', space=sflag, size = 0x4, scoped, tag = 'scoped memory for tpu_custom_call.1']
    #allocation7 [shape = 'u8[4096]{0}', space=vmem, size = 0x1000, scoped, tag = 'input window, operand 2, single buffered']
    #allocation8 [shape = 'u8[65536]{0}', space=vmem, size = 0x10000, scoped, tag = 'input window, operand 3, single buffered']
    #allocation9 [shape = 's32[1]{0}', space=sflag, size = 0x4, scoped, tag = 'scoped memory for tpu_custom_call.1']
    #allocation10 [shape = 'u8[196608]{0}', space=vmem, size = 0x30000, scoped, tag = 'input window, operand 4, single buffered']
    #allocation11 [shape = 'u8[4096]{0}', space=vmem, size = 0x1000, scoped, tag = 'output window, operand 0, single buffered']
    %12 = vsyncpa [#allocation3], 0
    %13 = vsyncpa [#allocation6], 0
    %14 = vsyncpa [#allocation9], 0
    %15 = vsyncpa [#allocation4], 0
    // Predicated region
    $region2: #{tpu_custom_call.1} parent=1 // pred_check
      _
    $region3: #{tpu_custom_call.1} parent=1 // pred_check_branch
      %17 = sbr.rel (0) target = $region5
    $region4: #{tpu_custom_call.1} parent=1 // pred_region
      %s19 = ssub.s32 128, 128
      %20 = vsyncadd [#allocation3], %s19
      %s22 = sshll.u32 [#allocation2], 4
      %s23 = int_to_ptr.vmem [resolvable:$true] %s22
      %25 = dma.hbm_to_vmem [thread:$0]  %s0, 128, %s23, [#allocation3]
    $region5: #{tpu_custom_call.1} parent=1 // pred_fallthru
      _
    // Predicated region
    $region6: #{tpu_custom_call.1} parent=1 // pred_check
      _
    $region7: #{tpu_custom_call.1} parent=1 // pred_check_branch
      %27 = sbr.rel (0) target = $region9
    $region8: #{tpu_custom_call.1} parent=1 // pred_region
      %s29 = ssub.s32 128, 128
      %30 = vsyncadd [#allocation6], %s29
      %s32 = sshll.u32 [#allocation5], 4
      %s33 = int_to_ptr.vmem [resolvable:$true] %s32
      %35 = dma.hbm_to_vmem [thread:$0]  %s1, 128, %s33, [#allocation6]
    $region9: #{tpu_custom_call.1} parent=1 // pred_fallthru
      _
    // Predicated region
    $region10: #{tpu_custom_call.1} parent=1 // pred_check
      _
    $region11: #{tpu_custom_call.1} parent=1 // pred_check_branch
      %37 = sbr.rel (0) target = $region13
    $region12: #{tpu_custom_call.1} parent=1 // pred_region
      %s39 = ssub.s32 128, 128
      %40 = vsyncadd [#allocation6], %s39
      %s42 = sshll.u32 [#allocation7], 4
      %s43 = int_to_ptr.vmem [resolvable:$true] %s42
      %45 = dma.hbm_to_vmem [thread:$0]  %s2, 128, %s43, [#allocation6]
    $region13: #{tpu_custom_call.1} parent=1 // pred_fallthru
      _
    // Predicated region
    $region14: #{tpu_custom_call.1} parent=1 // pred_check
      _
    $region15: #{tpu_custom_call.1} parent=1 // pred_check_branch
      %47 = sbr.rel (0) target = $region17
    $region16: #{tpu_custom_call.1} parent=1 // pred_region
      %s49 = ssub.s32 2048, 2048
      %50 = vsyncadd [#allocation9], %s49
      %s51 = sshll.u32 [#allocation8], 4
      %s52 = int_to_ptr.vmem [resolvable:$true] %s51
      %57 = dma.hbm_to_vmem [thread:$0]  %s3, 2048, %s52, [#allocation9], 128, 128, 8
    $region17: #{tpu_custom_call.1} parent=1 // pred_fallthru
      _
    // Predicated region
    $region18: #{tpu_custom_call.1} parent=1 // pred_check
      _
    $region19: #{tpu_custom_call.1} parent=1 // pred_check_branch
      %59 = sbr.rel (0) target = $region21
    $region20: #{tpu_custom_call.1} parent=1 // pred_region
      %s61 = ssub.s32 6144, 6144
      %62 = vsyncadd [#allocation9], %s61
      %s63 = sshll.u32 [#allocation10], 4
      %s64 = int_to_ptr.vmem [resolvable:$true] %s63
      %69 = dma.hbm_to_vmem [thread:$0]  %s4, 6144, %s64, [#allocation9], 384, 384, 24
    $region21: #{tpu_custom_call.1} parent=1 // pred_fallthru
      _
    // Predicated region
    $region22: #{tpu_custom_call.1} parent=1 // pred_check
      _
    $region23: #{tpu_custom_call.1} parent=1 // pred_check_branch
      %71 = sbr.rel (0) target = $region25
    $region24: #{tpu_custom_call.1} parent=1 // pred_region
      _
    $region25: #{tpu_custom_call.1} parent=1 // pred_fallthru
      _
    // Predicated region
    $region26: #{tpu_custom_call.1} parent=1 // pred_check
      _
    $region27: #{tpu_custom_call.1} parent=1 // pred_check_branch
      %73 = sbr.rel (0) target = $region29
    $region28: #{tpu_custom_call.1} parent=1 // pred_region
      _
    $region29: #{tpu_custom_call.1} parent=1 // pred_fallthru
      _
    // Predicated region
    $region30: #{tpu_custom_call.1} parent=1 // pred_check
      _
    $region31: #{tpu_custom_call.1} parent=1 // pred_check_branch
      %75 = sbr.rel (0) target = $region33
    $region32: #{tpu_custom_call.1} parent=1 // pred_region
      %76 = dma.done [#allocation3], 128
    $region33: #{tpu_custom_call.1} parent=1 // pred_fallthru
      _
    // Predicated region
    $region34: #{tpu_custom_call.1} parent=1 // pred_check
      _
    $region35: #{tpu_custom_call.1} parent=1 // pred_check_branch
      %78 = sbr.rel (0) target = $region37
    $region36: #{tpu_custom_call.1} parent=1 // pred_region
      %79 = dma.done [#allocation6], 128
    $region37: #{tpu_custom_call.1} parent=1 // pred_fallthru
      _
    // Predicated region
    $region38: #{tpu_custom_call.1} parent=1 // pred_check
      _
    $region39: #{tpu_custom_call.1} parent=1 // pred_check_branch
      %81 = sbr.rel (0) target = $region41
    $region40: #{tpu_custom_call.1} parent=1 // pred_region
      %82 = dma.done [#allocation6], 128
    $region41: #{tpu_custom_call.1} parent=1 // pred_fallthru
      _
    // Predicated region
    $region42: #{tpu_custom_call.1} parent=1 // pred_check
      _
    $region43: #{tpu_custom_call.1} parent=1 // pred_check_branch
      %84 = sbr.rel (0) target = $region45
    $region44: #{tpu_custom_call.1} parent=1 // pred_region
      %85 = dma.done [#allocation9], 2048
    $region45: #{tpu_custom_call.1} parent=1 // pred_fallthru
      _
    // Predicated region
    $region46: #{tpu_custom_call.1} parent=1 // pred_check
      _
    $region47: #{tpu_custom_call.1} parent=1 // pred_check_branch
      %87 = sbr.rel (0) target = $region49
    $region48: #{tpu_custom_call.1} parent=1 // pred_region
      %88 = dma.done [#allocation9], 6144
    $region49: #{tpu_custom_call.1} parent=1 // pred_fallthru
      _
    %v89 = vld [vmem:[#allocation8] sm:$0xff]
    %v90 = vld [vmem:[#allocation8 + $0x8] sm:$0xff]
    %v91 = vld [vmem:[#allocation8 + $0x10] sm:$0xff]
    %v92 = vld [vmem:[#allocation8 + $0x18] sm:$0xff]
    %v93 = vld [vmem:[#allocation8 + $0x20] sm:$0xff]
    %v94 = vld [vmem:[#allocation8 + $0x28] sm:$0xff]
    %v95 = vld [vmem:[#allocation8 + $0x30] sm:$0xff]
    %v96 = vld [vmem:[#allocation8 + $0x38] sm:$0xff]
    %v97 = vld [vmem:[#allocation8 + $0x40] sm:$0xff]
    %v98 = vld [vmem:[#allocation8 + $0x48] sm:$0xff]
    %v99 = vld [vmem:[#allocation8 + $0x50] sm:$0xff]
    %v100 = vld [vmem:[#allocation8 + $0x58] sm:$0xff]
    %v101 = vld [vmem:[#allocation8 + $0x60] sm:$0xff]
    %v102 = vld [vmem:[#allocation8 + $0x68] sm:$0xff]
    %v103 = vld [vmem:[#allocation8 + $0x70] sm:$0xff]
    %v104 = vld [vmem:[#allocation8 + $0x78] sm:$0xff]
    %v105 = vld [vmem:[#allocation10] sm:$0xff]
    %v106 = vld [vmem:[#allocation10 + $0x8] sm:$0xff]
    %v107 = vld [vmem:[#allocation10 + $0x10] sm:$0xff]
    %v108 = vld [vmem:[#allocation10 + $0x18] sm:$0xff]
    %v109 = vld [vmem:[#allocation10 + $0x20] sm:$0xff]
    %v110 = vld [vmem:[#allocation10 + $0x28] sm:$0xff]
    %v111 = vld [vmem:[#allocation10 + $0x30] sm:$0xff]
    %v112 = vld [vmem:[#allocation10 + $0x38] sm:$0xff]
    %v113 = vld [vmem:[#allocation10 + $0x40] sm:$0xff]
    %v114 = vld [vmem:[#allocation10 + $0x48] sm:$0xff]
    %v115 = vld [vmem:[#allocation10 + $0x50] sm:$0xff]
    %v116 = vld [vmem:[#allocation10 + $0x58] sm:$0xff]
    %v117 = vld [vmem:[#allocation10 + $0x60] sm:$0xff]
    %v118 = vld [vmem:[#allocation10 + $0x68] sm:$0xff]
    %v119 = vld [vmem:[#allocation10 + $0x70] sm:$0xff]
    %v120 = vld [vmem:[#allocation10 + $0x78] sm:$0xff]
    %v121 = vld [vmem:[#allocation10 + $0x80] sm:$0xff]
    %v122 = vld [vmem:[#allocation10 + $0x88] sm:$0xff]
    %v123 = vld [vmem:[#allocation10 + $0x90] sm:$0xff]
    %v124 = vld [vmem:[#allocation10 + $0x98] sm:$0xff]
    %v125 = vld [vmem:[#allocation10 + $0xa0] sm:$0xff]
    %v126 = vld [vmem:[#allocation10 + $0xa8] sm:$0xff]
    %v127 = vld [vmem:[#allocation10 + $0xb0] sm:$0xff]
    %v128 = vld [vmem:[#allocation10 + $0xb8] sm:$0xff]
    %v129 = vld [vmem:[#allocation10 + $0xc0] sm:$0xff]
    %v130 = vld [vmem:[#allocation10 + $0xc8] sm:$0xff]
    %v131 = vld [vmem:[#allocation10 + $0xd0] sm:$0xff]
    %v132 = vld [vmem:[#allocation10 + $0xd8] sm:$0xff]
    %v133 = vld [vmem:[#allocation10 + $0xe0] sm:$0xff]
    %v134 = vld [vmem:[#allocation10 + $0xe8] sm:$0xff]
    %v135 = vld [vmem:[#allocation10 + $0xf0] sm:$0xff]
    %v136 = vld [vmem:[#allocation10 + $0xf8] sm:$0xff]
    %v137 = vld [vmem:[#allocation10 + $0x100] sm:$0xff]
    %v138 = vld [vmem:[#allocation10 + $0x108] sm:$0xff]
    %v139 = vld [vmem:[#allocation10 + $0x110] sm:$0xff]
    %v140 = vld [vmem:[#allocation10 + $0x118] sm:$0xff]
    %v141 = vld [vmem:[#allocation10 + $0x120] sm:$0xff]
    %v142 = vld [vmem:[#allocation10 + $0x128] sm:$0xff]
    %v143 = vld [vmem:[#allocation10 + $0x130] sm:$0xff]
    %v144 = vld [vmem:[#allocation10 + $0x138] sm:$0xff]
    %v145 = vld [vmem:[#allocation10 + $0x140] sm:$0xff]
    %v146 = vld [vmem:[#allocation10 + $0x148] sm:$0xff]
    %v147 = vld [vmem:[#allocation10 + $0x150] sm:$0xff]
    %v148 = vld [vmem:[#allocation10 + $0x158] sm:$0xff]
    %v149 = vld [vmem:[#allocation10 + $0x160] sm:$0xff]
    %v150 = vld [vmem:[#allocation10 + $0x168] sm:$0xff]
    %v151 = vld [vmem:[#allocation10 + $0x170] sm:$0xff]
    %v152 = vld [vmem:[#allocation10 + $0x178] sm:$0xff]
    %v153 = vld [vmem:[#allocation2] sm:$0xff]
    %v154 = vld [vmem:[#allocation5] sm:$0xff]
    %v155 = vld [vmem:[%s5] sm:$0x1]
    %v157 = vlaneseq
    %v158 = vshrl.u32 %v157, 7
    %v159 = vsub.s32 0, %v158
    %v160 = vrot.slane %v155, %v159
    %162 = vmatprep.subr.mxu0 0.0
    %163 = vmatpush1.msra.mxu0 %v104
    %164 = vmatprep.subr.mxu0 0.0
    %165 = vmatpush1.msra.mxu0 %v103
    %166 = vmatprep.subr.mxu0 0.0
    %167 = vmatpush1.msra.mxu0 %v102
    %168 = vmatprep.subr.mxu0 0.0
    %169 = vmatpush1.msra.mxu0 %v101
    %170 = vmatprep.subr.mxu0 0.0
    %171 = vmatpush1.msra.mxu0 %v100
    %172 = vmatprep.subr.mxu0 0.0
    %173 = vmatpush1.msra.mxu0 %v99
    %174 = vmatprep.subr.mxu0 0.0
    %175 = vmatpush1.msra.mxu0 %v98
    %176 = vmatprep.subr.mxu0 0.0
    %177 = vmatpush1.msra.mxu0 %v97
    %178 = vmatprep.subr.mxu0 0.0
    %179 = vmatpush1.msra.mxu0 %v96
    %180 = vmatprep.subr.mxu0 0.0
    %181 = vmatpush1.msra.mxu0 %v95
    %182 = vmatprep.subr.mxu0 0.0
    %183 = vmatpush1.msra.mxu0 %v94
    %184 = vmatprep.subr.mxu0 0.0
    %185 = vmatpush1.msra.mxu0 %v93
    %186 = vmatprep.subr.mxu0 0.0
    %187 = vmatpush1.msra.mxu0 %v92
    %188 = vmatprep.subr.mxu0 0.0
    %189 = vmatpush1.msra.mxu0 %v91
    %190 = vmatprep.subr.mxu0 0.0
    %191 = vmatpush1.msra.mxu0 %v90
    %192 = vmatprep.subr.mxu0 0.0
    %193 = vmatpush1.msra.mxu0 %v89
    %194 = vmatprep.subr.mxu0 0.0
    %195 = vmatpush2.msra.mxu0 0.0
    %196 = vmatprep.subr.mxu0 0.0
    %197 = vmatpush2.msra.mxu0 0.0
    %198 = vmatprep.subr.mxu0 0.0
    %199 = vmatpush2.msra.mxu0 0.0
    %200 = vmatprep.subr.mxu0 0.0
    %201 = vmatpush2.msra.mxu0 0.0
    %202 = vmatprep.subr.mxu0 0.0
    %203 = vmatpush2.msra.mxu0 0.0
    %204 = vmatprep.subr.mxu0 0.0
    %205 = vmatpush2.msra.mxu0 0.0
    %206 = vmatprep.subr.mxu0 0.0
    %207 = vmatpush2.msra.mxu0 0.0
    %208 = vmatprep.subr.mxu0 0.0
    %209 = vmatpush2.msra.mxu0 0.0
    %210 = vmatprep.subr.mxu0 0.0
    %211 = vmatpush2.msra.mxu0 0.0
    %212 = vmatprep.subr.mxu0 0.0
    %213 = vmatpush2.msra.mxu0 0.0
    %214 = vmatprep.subr.mxu0 0.0
    %215 = vmatpush2.msra.mxu0 0.0
    %216 = vmatprep.subr.mxu0 0.0
    %217 = vmatpush2.msra.mxu0 0.0
    %218 = vmatprep.subr.mxu0 0.0
    %219 = vmatpush2.msra.mxu0 0.0
    %220 = vmatprep.subr.mxu0 0.0
    %221 = vmatpush2.msra.mxu0 0.0
    %222 = vmatprep.subr.mxu0 0.0
    %223 = vmatpush2.msra.mxu0 0.0
    %224 = vmatprep.subr.mxu0 0.0
    %225 = vmatpush2.msra.mxu0 0.0
    %226 = vmatprep.mubr.f32.mxu0 0.0
    %227 = vmatmul.mubr.f32.gmra.mxu0 %v153
    %v228 = vpop.f32.mrf.mxu0
    %v229 = vadd.f32 %v160, %v228
    %v230 = vpop.f32.mrf.mxu0
    %231 = vdwg.mxu0
    %v232 = vld [vmem:[%s6] sm:$0x7]
    %v234 = vlaneseq
    %v235 = vshrl.u32 %v234, 7
    %v236 = vsub.s32 0, %v235
    %v237 = vrot.slane %v232, %v236
    %v238 = vlaneseq
    %v239 = vshrl.u32 %v238, 7
    %v240 = vsub.s32 1, %v239
    %v241 = vrot.slane %v232, %v240
    %v242 = vlaneseq
    %v243 = vshrl.u32 %v242, 7
    %v244 = vsub.s32 2, %v243
    %v245 = vrot.slane %v232, %v244
    %249 = vmatprep.subr.mxu0 %v151
    %250 = vmatpush1.msra.mxu0 %v150
    %251 = vmatprep.subr.mxu0 %v148
    %252 = vmatpush1.msra.mxu0 %v147
    %253 = vmatprep.subr.mxu0 %v145
    %254 = vmatpush1.msra.mxu0 %v144
    %255 = vmatprep.subr.mxu0 %v142
    %256 = vmatpush1.msra.mxu0 %v141
    %257 = vmatprep.subr.mxu0 %v139
    %258 = vmatpush1.msra.mxu0 %v138
    %259 = vmatprep.subr.mxu0 %v136
    %260 = vmatpush1.msra.mxu0 %v135
    %261 = vmatprep.subr.mxu0 %v133
    %262 = vmatpush1.msra.mxu0 %v132
    %263 = vmatprep.subr.mxu0 %v130
    %264 = vmatpush1.msra.mxu0 %v129
    %265 = vmatprep.subr.mxu0 %v127
    %266 = vmatpush1.msra.mxu0 %v126
    %267 = vmatprep.subr.mxu0 %v124
    %268 = vmatpush1.msra.mxu0 %v123
    %269 = vmatprep.subr.mxu0 %v121
    %270 = vmatpush1.msra.mxu0 %v120
    %271 = vmatprep.subr.mxu0 %v118
    %272 = vmatpush1.msra.mxu0 %v117
    %273 = vmatprep.subr.mxu0 %v115
    %274 = vmatpush1.msra.mxu0 %v114
    %275 = vmatprep.subr.mxu0 %v112
    %276 = vmatpush1.msra.mxu0 %v111
    %277 = vmatprep.subr.mxu0 %v109
    %278 = vmatpush1.msra.mxu0 %v108
    %279 = vmatprep.subr.mxu0 %v106
    %280 = vmatpush1.msra.mxu0 %v105
    %281 = vmatprep.subr.mxu0 0.0
    %282 = vmatpush2.msra.mxu0 0.0
    %283 = vmatprep.subr.mxu0 0.0
    %284 = vmatpush2.msra.mxu0 0.0
    %285 = vmatprep.subr.mxu0 0.0
    %286 = vmatpush2.msra.mxu0 0.0
    %287 = vmatprep.subr.mxu0 0.0
    %288 = vmatpush2.msra.mxu0 0.0
    %289 = vmatprep.subr.mxu0 0.0
    %290 = vmatpush2.msra.mxu0 0.0
    %291 = vmatprep.subr.mxu0 0.0
    %292 = vmatpush2.msra.mxu0 0.0
    %293 = vmatprep.subr.mxu0 0.0
    %294 = vmatpush2.msra.mxu0 0.0
    %295 = vmatprep.subr.mxu0 0.0
    %296 = vmatpush2.msra.mxu0 0.0
    %297 = vmatprep.subr.mxu0 0.0
    %298 = vmatpush2.msra.mxu0 0.0
    %299 = vmatprep.subr.mxu0 0.0
    %300 = vmatpush2.msra.mxu0 0.0
    %301 = vmatprep.subr.mxu0 0.0
    %302 = vmatpush2.msra.mxu0 0.0
    %303 = vmatprep.subr.mxu0 0.0
    %304 = vmatpush2.msra.mxu0 0.0
    %305 = vmatprep.subr.mxu0 0.0
    %306 = vmatpush2.msra.mxu0 0.0
    %307 = vmatprep.subr.mxu0 0.0
    %308 = vmatpush2.msra.mxu0 0.0
    %309 = vmatprep.subr.mxu0 0.0
    %310 = vmatpush2.msra.mxu0 0.0
    %311 = vmatprep.subr.mxu0 0.0
    %312 = vmatpush2.msra.mxu0 0.0
    %313 = vmatprep.mubr.f32.mxu0 0.0
    %314 = vmatmul.mubr.f32.gmra.mxu0 %v154
    %v315 = vpop.f32.mrf.mxu0
    %v316 = vadd.f32 %v237, %v315
    %v317 = vpop.f32.mrf.mxu0
    %v318 = vadd.f32 %v241, %v317
    %319 = vdwg.mxu0
    %320 = vmatprep.subr.mxu0 0.0
    %321 = vmatpush1.msra.mxu0 %v152
    %322 = vmatprep.subr.mxu0 0.0
    %323 = vmatpush1.msra.mxu0 %v149
    %324 = vmatprep.subr.mxu0 0.0
    %325 = vmatpush1.msra.mxu0 %v146
    %326 = vmatprep.subr.mxu0 0.0
    %327 = vmatpush1.msra.mxu0 %v143
    %328 = vmatprep.subr.mxu0 0.0
    %329 = vmatpush1.msra.mxu0 %v140
    %330 = vmatprep.subr.mxu0 0.0
    %331 = vmatpush1.msra.mxu0 %v137
    %332 = vmatprep.subr.mxu0 0.0
    %333 = vmatpush1.msra.mxu0 %v134
    %334 = vmatprep.subr.mxu0 0.0
    %335 = vmatpush1.msra.mxu0 %v131
    %336 = vmatprep.subr.mxu0 0.0
    %337 = vmatpush1.msra.mxu0 %v128
    %338 = vmatprep.subr.mxu0 0.0
    %339 = vmatpush1.msra.mxu0 %v125
    %340 = vmatprep.subr.mxu0 0.0
    %341 = vmatpush1.msra.mxu0 %v122
    %342 = vmatprep.subr.mxu0 0.0
    %343 = vmatpush1.msra.mxu0 %v119
    %344 = vmatprep.subr.mxu0 0.0
    %345 = vmatpush1.msra.mxu0 %v116
    %346 = vmatprep.subr.mxu0 0.0
    %347 = vmatpush1.msra.mxu0 %v113
    %348 = vmatprep.subr.mxu0 0.0
    %349 = vmatpush1.msra.mxu0 %v110
    %350 = vmatprep.subr.mxu0 0.0
    %351 = vmatpush1.msra.mxu0 %v107
    %352 = vmatprep.subr.mxu0 0.0
    %353 = vmatpush2.msra.mxu0 0.0
    %354 = vmatprep.subr.mxu0 0.0
    %355 = vmatpush2.msra.mxu0 0.0
    %356 = vmatprep.subr.mxu0 0.0
    %357 = vmatpush2.msra.mxu0 0.0
    %358 = vmatprep.subr.mxu0 0.0
    %359 = vmatpush2.msra.mxu0 0.0
    %360 = vmatprep.subr.mxu0 0.0
    %361 = vmatpush2.msra.mxu0 0.0
    %362 = vmatprep.subr.mxu0 0.0
    %363 = vmatpush2.msra.mxu0 0.0
    %364 = vmatprep.subr.mxu0 0.0
    %365 = vmatpush2.msra.mxu0 0.0
    %366 = vmatprep.subr.mxu0 0.0
    %367 = vmatpush2.msra.mxu0 0.0
    %368 = vmatprep.subr.mxu0 0.0
    %369 = vmatpush2.msra.mxu0 0.0
    %370 = vmatprep.subr.mxu0 0.0
    %371 = vmatpush2.msra.mxu0 0.0
    %372 = vmatprep.subr.mxu0 0.0
    %373 = vmatpush2.msra.mxu0 0.0
    %374 = vmatprep.subr.mxu0 0.0
    %375 = vmatpush2.msra.mxu0 0.0
    %376 = vmatprep.subr.mxu0 0.0
    %377 = vmatpush2.msra.mxu0 0.0
    %378 = vmatprep.subr.mxu0 0.0
    %379 = vmatpush2.msra.mxu0 0.0
    %380 = vmatprep.subr.mxu0 0.0
    %381 = vmatpush2.msra.mxu0 0.0
    %382 = vmatprep.subr.mxu0 0.0
    %383 = vmatpush2.msra.mxu0 0.0
    %384 = vmatprep.mubr.f32.mxu0 0.0
    %385 = vmatmul.mubr.f32.gmra.mxu0 %v154
    %v386 = vpop.f32.mrf.mxu0
    %v387 = vadd.f32 %v245, %v386
    %v388 = vpop.f32.mrf.mxu0
    %389 = vdwg.mxu0
    %v390 = vxor.u32 %v316, 2147483648
    %v391 = vmul.f32 %v390, 1.442695
    %v392 = vpow.pop %v391
    %v393 = vadd.f32 %v392, 1.0
    %v394 = vrcp.pop %v393
    %v395 = vmul.f32 1.0, %v394
    %v396 = vxor.u32 %v318, 2147483648
    %v397 = vmul.f32 %v396, 1.442695
    %v398 = vpow.pop %v397
    %v399 = vadd.f32 %v398, 1.0
    %v400 = vrcp.pop %v399
    %v401 = vmul.f32 1.0, %v400
    %v402 = vmul.f32 %v395, %v387
    %v403 = vadd.f32 %v229, %v402
    %v404 = vtanh.pop %v403
    %v405 = vld [vmem:[#allocation7] sm:$0xff]
    %v406 = vsub.f32 %v405, %v404
    %v407 = vmul.f32 %v401, %v406
    %v408 = vadd.f32 %v404, %v407
    %409 = vst [vmem:[#allocation11] sm:$0xff] %v408
    // Predicated region
    $region50: #{tpu_custom_call.1} parent=1 // pred_check
      _
    $region51: #{tpu_custom_call.1} parent=1 // pred_check_branch
      %411 = sbr.rel (0) target = $region53
    $region52: #{tpu_custom_call.1} parent=1 // pred_region
      %s413 = ssub.s32 128, 128
      %414 = vsyncadd [#allocation4], %s413
      %s416 = sshll.u32 [#allocation11], 4
      %s417 = int_to_ptr.vmem [resolvable:$true] %s416
      %419 = dma.vmem_to_hbm [thread:$0]  %s417, 128, %s7, [#allocation4]
    $region53: #{tpu_custom_call.1} parent=1 // pred_fallthru
      _
    // Predicated region
    $region54: #{tpu_custom_call.1} parent=1 // pred_check
      _
    $region55: #{tpu_custom_call.1} parent=1 // pred_check_branch
      %421 = sbr.rel (0) target = $region57
    $region56: #{tpu_custom_call.1} parent=1 // pred_region
      %422 = dma.done [#allocation4], 128
    $region57: #{tpu_custom_call.1} parent=1 // pred_fallthru
      _
    %423 = vsyncpa [#allocation3], 1
    %424 = vsyncpa [#allocation6], 1
    %425 = vsyncpa [#allocation9], 1
    %426 = vsyncpa [#allocation4], 1

</llo_original>
